<compile_context>
chip_gen: v7x
topology: tpu7x:2x2x1
jax: 0.10.0
libtpu: 0.0.40
codegen_flags: <defaults>
</compile_context>

<pallas_src>
import functools

import jax
import jax.numpy as jnp
from jax import lax
from jax.experimental import pallas as pl
from jax.experimental.pallas import tpu as pltpu


def _conv_block_kernel(x_ref, s1_ref, b1_ref, w1_ref, b2_ref, w3_ref,
                       mkw0_ref, mkw2_ref, out_ref, pad_ref, *, H, W, C2p):
    HW = H * W

    x = x_ref[0]                                          # (Cin, HW)

    # --- BN1 (folded) + ReLU:  channels on sublanes, pixels on lanes ---
    t = jnp.maximum(x * s1_ref[...] + b1_ref[...], 0.0)   # (Cin, HW)

    # --- Conv 1x1 (BN2 scale pre-folded into the weights) + BN2 bias + ReLU ---
    # w1_ref is (C2p, Cin) with rows Cout..C2p-1 zero, so t2 pad rows stay zero.
    # NOTE: on v6e/v7x the dot operands could be cast to bf16 for 2x MXU rate; kept
    # f32 here so the strict 1e-4 check below holds on every chip.
    t2 = jnp.dot(w1_ref[...], t, preferred_element_type=jnp.float32)
    t2 = jnp.maximum(t2 + b2_ref[...], 0.0)               # (C2p, HW)

    # --- Conv 3x3 "same" -----------------------------------------------------
    # pad_ref: (3*C2p, HW + 2W).  Zero only the two (W+1)-wide side strips (they model
    # the out-of-image rows), then store one copy of t2 per kw tap at lane offset
    # (W + 1 - kw), pre-masked so row-boundary wrap positions read zero.  After that,
    # the kh-th row of the stencil is the contiguous window pad_ref[:, kh*W : kh*W+HW].
    # The strips are re-zeroed every step (cheap: 2 x (3*C2p, W+1) stores) so the kernel
    # stays correct when the grid axis is split across cores on v7x megacore.
    strip = jnp.zeros((3 * C2p, W + 1), jnp.float32)
    pad_ref[:, 0:W + 1] = strip
    pad_ref[:, HW + W - 1:HW + 2 * W] = strip

    # kw = 0 (dw = -1): legit reads never touch source column W-1 -> zero it.
    pad_ref[0 * C2p:1 * C2p, W + 1:W + 1 + HW] = t2 * mkw0_ref[...]
    # kw = 1 (dw =  0): unshifted, unmasked.
    pad_ref[1 * C2p:2 * C2p, W:W + HW] = t2
    # kw = 2 (dw = +1): legit reads never touch source column 0 -> zero it.
    pad_ref[2 * C2p:3 * C2p, W - 1:W - 1 + HW] = t2 * mkw2_ref[...]

    # Three MXU dots (one per kh row of the stencil), accumulated in f32.
    out = jnp.dot(w3_ref[0], pad_ref[:, 0:HW],
                  preferred_element_type=jnp.float32)
    out = out + jnp.dot(w3_ref[1], pad_ref[:, W:W + HW],
                        preferred_element_type=jnp.float32)
    out = out + jnp.dot(w3_ref[2], pad_ref[:, 2 * W:2 * W + HW],
                        preferred_element_type=jnp.float32)

    out_ref[0] = out.astype(out_ref.dtype)                # (Cout, HW), lanes dense


def conv_block_pallas(x_nchw, gamma1, beta1, mean1, var1, w_conv1,
                      gamma2, beta2, mean2, var2, w_conv3, eps=1e-5):
    """x_nchw: (N, Cin, H, W).  Returns (N, Cout, H, W)."""
    N, Cin, H, W = x_nchw.shape
    Cout = w_conv1.shape[0]
    HW = H * W
    C2p = ((Cout + 7) // 8) * 8        # conv1 output channels padded to a sublane tile
    f32 = jnp.float32

    # Fold BN (eval mode) into per-channel scale / bias.
    s1 = (gamma1 / jnp.sqrt(var1 + eps)).astype(f32)
    b1 = (beta1 - mean1 * s1).astype(f32)
    s2 = (gamma2 / jnp.sqrt(var2 + eps)).astype(f32)
    b2 = (beta2 - mean2 * s2).astype(f32)

    # 1x1 conv weights with the BN2 scale folded in, padded to C2p rows.
    w1f = w_conv1[:, :, 0, 0].astype(f32) * s2[:, None]              # (Cout, Cin)
    w1f = jnp.pad(w1f, ((0, C2p - Cout), (0, 0)))                    # (C2p, Cin)
    b2p = jnp.pad(b2[:, None], ((0, C2p - Cout), (0, 0)))            # (C2p, 1)

    # 3x3 weights grouped per kh row: w3g[kh, o, kw*C2p + i] = w_conv3[o, i, kh, kw].
    w3t = jnp.transpose(w_conv3.astype(f32), (2, 0, 3, 1))           # (KH, O, KW, I)
    w3t = jnp.pad(w3t, ((0, 0), (0, 0), (0, 0), (0, C2p - Cout)))    # pad I -> C2p
    w3g = w3t.reshape(3, Cout, 3 * C2p)

    # Column-boundary masks (1 = keep), one HW-lane row each, built host-side so the
    # kernel does zero per-step mask arithmetic.
    colw = jnp.arange(HW, dtype=jnp.int32) % W
    mkw0 = (colw != W - 1).astype(f32).reshape(1, HW)   # kw=0 tap never reads src col W-1
    mkw2 = (colw != 0).astype(f32).reshape(1, HW)       # kw=2 tap never reads src col 0

    # Channel-major, lane-dense layout: (N, C, H*W).  Reshape only, no transposes.
    x_flat = x_nchw.reshape(N, Cin, HW).astype(f32)

    kernel = functools.partial(_conv_block_kernel, H=H, W=W, C2p=C2p)

    # TODO(synk): for production DenseNet feature maps (H, W >= 56) tile over H with a
    # 1-row halo per block and set vmem_limit_bytes; at this size one image per grid
    # step fits comfortably in VMEM on v5e/v6e/v7x.
    out_flat = pl.pallas_call(
        kernel,
        out_shape=jax.ShapeDtypeStruct((N, Cout, HW), f32),
        grid_spec=pltpu.PrefetchScalarGridSpec(
            num_scalar_prefetch=0,
            grid=(N,),
            in_specs=[
                pl.BlockSpec((1, Cin, HW), lambda n: (n, 0, 0)),     # x
                pl.BlockSpec((Cin, 1), lambda n: (0, 0)),            # BN1 scale
                pl.BlockSpec((Cin, 1), lambda n: (0, 0)),            # BN1 bias
                pl.BlockSpec((C2p, Cin), lambda n: (0, 0)),          # fused 1x1 weights
                pl.BlockSpec((C2p, 1), lambda n: (0, 0)),            # BN2 bias
                pl.BlockSpec((3, Cout, 3 * C2p), lambda n: (0, 0, 0)),  # grouped 3x3 w
                pl.BlockSpec((1, HW), lambda n: (0, 0)),             # mask kw=0
                pl.BlockSpec((1, HW), lambda n: (0, 0)),             # mask kw=2
            ],
            out_specs=pl.BlockSpec((1, Cout, HW), lambda n: (n, 0, 0)),
            scratch_shapes=[pltpu.VMEM((3 * C2p, HW + 2 * W), f32)],
        ),
        compiler_params=pltpu.CompilerParams(
            dimension_semantics=("parallel",)),   # one image per TC on v7x megacore
    )(x_flat, s1.reshape(Cin, 1), b1.reshape(Cin, 1), w1f, b2p, w3g, mkw0, mkw2)

    return out_flat.reshape(N, Cout, H, W)


def conv_block_reference(x, gamma1, beta1, mean1, var1, w_conv1,
                         gamma2, beta2, mean2, var2, w_conv3, eps=1e-5):
    """Plain-JAX reference (NCHW), mirrors the PyTorch module in eval mode."""
    def bn(z, g, b, m, v):
        return (z - m[None, :, None, None]) / jnp.sqrt(v + eps)[None, :, None, None] \
               * g[None, :, None, None] + b[None, :, None, None]

    t = jax.nn.relu(bn(x, gamma1, beta1, mean1, var1))
    y = lax.conv_general_dilated(t, w_conv1, window_strides=(1, 1), padding="SAME",
                                 dimension_numbers=("NCHW", "OIHW", "NCHW"))
    t2 = jax.nn.relu(bn(y, gamma2, beta2, mean2, var2))
    y2 = lax.conv_general_dilated(t2, w_conv3, window_strides=(1, 1), padding="SAME",
                                  dimension_numbers=("NCHW", "OIHW", "NCHW"))
    return y2


if __name__ == "__main__":
    N, Cin, Cout, H, W = 2, 12, 12, 16, 16

    key = jax.random.PRNGKey(0)
    keys = jax.random.split(key, 11)

    x = jax.random.normal(keys[0], (N, Cin, H, W), jnp.float32)

    # BN1 params (deterministic, non-trivial)
    gamma1 = jax.random.uniform(keys[1], (Cin,), jnp.float32, 0.5, 1.5)
    beta1 = 0.1 * jax.random.normal(keys[2], (Cin,), jnp.float32)
    mean1 = 0.1 * jax.random.normal(keys[3], (Cin,), jnp.float32)
    var1 = jax.random.uniform(keys[4], (Cin,), jnp.float32, 0.5, 1.5)

    # Conv1 (1x1, no bias): (Cout, Cin, 1, 1)
    w_conv1 = 0.2 * jax.random.normal(keys[5], (Cout, Cin, 1, 1), jnp.float32)

    # BN2 params
    gamma2 = jax.random.uniform(keys[6], (Cout,), jnp.float32, 0.5, 1.5)
    beta2 = 0.1 * jax.random.normal(keys[7], (Cout,), jnp.float32)
    mean2 = 0.1 * jax.random.normal(keys[8], (Cout,), jnp.float32)
    var2 = jax.random.uniform(keys[9], (Cout,), jnp.float32, 0.5, 1.5)

    # Conv3 (3x3, no bias): (Cout, Cout, 3, 3)
    w_conv3 = 0.2 * jax.random.normal(keys[10], (Cout, Cout, 3, 3), jnp.float32)

    out = conv_block_pallas(x, gamma1, beta1, mean1, var1, w_conv1,
                            gamma2, beta2, mean2, var2, w_conv3)
    out = jax.block_until_ready(out)

    ref = conv_block_reference(x, gamma1, beta1, mean1, var1, w_conv1,
                               gamma2, beta2, mean2, var2, w_conv3)
    ref = jax.block_until_ready(ref)

    assert out.shape == (N, Cout, H, W)
    assert jnp.max(jnp.abs(out - ref)) < 1e-4

    print("KERNEL_OK")
</pallas_src>

<mosaic_0001>
module attributes {stable_mosaic.version = 11 : i64} {
  func.func @_conv_block_kernel(%arg0: i32, %arg1: memref<1x12x256xf32, #tpu.memory_space<vmem>>, %arg2: memref<12x1xf32, #tpu.memory_space<vmem>>, %arg3: memref<12x1xf32, #tpu.memory_space<vmem>>, %arg4: memref<16x12xf32, #tpu.memory_space<vmem>>, %arg5: memref<16x1xf32, #tpu.memory_space<vmem>>, %arg6: memref<3x12x48xf32, #tpu.memory_space<vmem>>, %arg7: memref<1x256xf32, #tpu.memory_space<vmem>>, %arg8: memref<1x256xf32, #tpu.memory_space<vmem>>, %arg9: memref<1x12x256xf32, #tpu.memory_space<vmem>>, %arg10: memref<48x288xf32, #tpu.memory_space<vmem>>) attributes {dimension_semantics = [#tpu.dimension_semantics<parallel>], iteration_bounds = array<i64: 2>, scalar_prefetch = 0 : i64, scratch_operands = 1 : i64, tpu.core_type = #tpu.core_type<tc>, window_params = [{transform_indices = @transform_0, window_bounds = array<i64: 1, 12, 256>}, {pipeline_mode = #tpu.pipeline_mode<synchronous>, transform_indices = @transform_1, window_bounds = array<i64: 12, 1>}, {pipeline_mode = #tpu.pipeline_mode<synchronous>, transform_indices = @transform_2, window_bounds = array<i64: 12, 1>}, {pipeline_mode = #tpu.pipeline_mode<synchronous>, transform_indices = @transform_3, window_bounds = array<i64: 16, 12>}, {pipeline_mode = #tpu.pipeline_mode<synchronous>, transform_indices = @transform_4, window_bounds = array<i64: 16, 1>}, {pipeline_mode = #tpu.pipeline_mode<synchronous>, transform_indices = @transform_5, window_bounds = array<i64: 3, 12, 48>}, {pipeline_mode = #tpu.pipeline_mode<synchronous>, transform_indices = @transform_6, window_bounds = array<i64: 1, 256>}, {pipeline_mode = #tpu.pipeline_mode<synchronous>, transform_indices = @transform_7, window_bounds = array<i64: 1, 256>}, {transform_indices = @transform_8, window_bounds = array<i64: 1, 12, 256>}]} {
    %c0 = arith.constant 0 : index
    %c0_0 = arith.constant 0 : index
    %c0_1 = arith.constant 0 : index
    %0 = vector.load %arg1[%c0, %c0_0, %c0_1] : memref<1x12x256xf32, #tpu.memory_space<vmem>>, vector<1x12x256xf32>
    %1 = vector.shape_cast %0 : vector<1x12x256xf32> to vector<12x256xf32>
    %c0_2 = arith.constant 0 : index
    %c0_3 = arith.constant 0 : index
    %2 = vector.load %arg2[%c0_2, %c0_3] : memref<12x1xf32, #tpu.memory_space<vmem>>, vector<12x1xf32>
    %3 = vector.broadcast %2 : vector<12x1xf32> to vector<12x256xf32>
    %4 = arith.mulf %1, %3 : vector<12x256xf32>
    %c0_4 = arith.constant 0 : index
    %c0_5 = arith.constant 0 : index
    %5 = vector.load %arg3[%c0_4, %c0_5] : memref<12x1xf32, #tpu.memory_space<vmem>>, vector<12x1xf32>
    %6 = vector.broadcast %5 : vector<12x1xf32> to vector<12x256xf32>
    %7 = arith.addf %4, %6 : vector<12x256xf32>
    %cst = arith.constant 0.000000e+00 : f32
    %8 = vector.broadcast %cst : f32 to vector<12x256xf32>
    %9 = arith.maximumf %7, %8 : vector<12x256xf32>
    %c0_6 = arith.constant 0 : index
    %c0_7 = arith.constant 0 : index
    %10 = vector.load %arg4[%c0_6, %c0_7] : memref<16x12xf32, #tpu.memory_space<vmem>>, vector<16x12xf32>
    %cst_8 = arith.constant dense<0.000000e+00> : vector<16x256xf32>
    %11 = tpu.matmul %10, %9, %cst_8 {dimension_numbers = #tpu.dot_dimension_numbers<[1], [0], [0], [1], [0, 0, 1, 1], [], []>} : vector<16x12xf32>, vector<12x256xf32>, vector<16x256xf32> -> vector<16x256xf32>
    %c0_9 = arith.constant 0 : index
    %c0_10 = arith.constant 0 : index
    %12 = vector.load %arg5[%c0_9, %c0_10] : memref<16x1xf32, #tpu.memory_space<vmem>>, vector<16x1xf32>
    %13 = vector.broadcast %12 : vector<16x1xf32> to vector<16x256xf32>
    %14 = arith.addf %11, %13 : vector<16x256xf32>
    %cst_11 = arith.constant 0.000000e+00 : f32
    %15 = vector.broadcast %cst_11 : f32 to vector<16x256xf32>
    %16 = arith.maximumf %14, %15 : vector<16x256xf32>
    %cst_12 = arith.constant 0.000000e+00 : f32
    %17 = vector.broadcast %cst_12 : f32 to vector<48x17xf32>
    %c0_13 = arith.constant 0 : index
    %c0_14 = arith.constant 0 : index
    %18 = vector.load %arg10[%c0_13, %c0_14] : memref<48x288xf32, #tpu.memory_space<vmem>>, vector<48x17xf32>
    tpu.vector_store %arg10[%c0_13, %c0_14], %17 {strides = array<i32>} : memref<48x288xf32, #tpu.memory_space<vmem>>, vector<48x17xf32>,
    %c0_15 = arith.constant 0 : index
    %c271 = arith.constant 271 : index
    %19 = vector.load %arg10[%c0_15, %c271] : memref<48x288xf32, #tpu.memory_space<vmem>>, vector<48x17xf32>
    tpu.vector_store %arg10[%c0_15, %c271], %17 {strides = array<i32>} : memref<48x288xf32, #tpu.memory_space<vmem>>, vector<48x17xf32>,
    %c0_16 = arith.constant 0 : index
    %c0_17 = arith.constant 0 : index
    %20 = vector.load %arg7[%c0_16, %c0_17] : memref<1x256xf32, #tpu.memory_space<vmem>>, vector<1x256xf32>
    %21 = vector.broadcast %20 : vector<1x256xf32> to vector<16x256xf32>
    %22 = arith.mulf %16, %21 : vector<16x256xf32>
    %c0_18 = arith.constant 0 : index
    %c17 = arith.constant 17 : index
    %23 = vector.load %arg10[%c0_18, %c17] : memref<48x288xf32, #tpu.memory_space<vmem>>, vector<16x256xf32>
    tpu.vector_store %arg10[%c0_18, %c17], %22 {strides = array<i32>} : memref<48x288xf32, #tpu.memory_space<vmem>>, vector<16x256xf32>,
    %c16 = arith.constant 16 : index
    %c16_19 = arith.constant 16 : index
    %24 = vector.load %arg10[%c16, %c16_19] : memref<48x288xf32, #tpu.memory_space<vmem>>, vector<16x256xf32>
    tpu.vector_store %arg10[%c16, %c16_19], %16 {strides = array<i32>} : memref<48x288xf32, #tpu.memory_space<vmem>>, vector<16x256xf32>,
    %c0_20 = arith.constant 0 : index
    %c0_21 = arith.constant 0 : index
    %25 = vector.load %arg8[%c0_20, %c0_21] : memref<1x256xf32, #tpu.memory_space<vmem>>, vector<1x256xf32>
    %26 = vector.broadcast %25 : vector<1x256xf32> to vector<16x256xf32>
    %27 = arith.mulf %16, %26 : vector<16x256xf32>
    %c32 = arith.constant 32 : index
    %c15 = arith.constant 15 : index
    %28 = vector.load %arg10[%c32, %c15] : memref<48x288xf32, #tpu.memory_space<vmem>>, vector<16x256xf32>
    tpu.vector_store %arg10[%c32, %c15], %27 {strides = array<i32>} : memref<48x288xf32, #tpu.memory_space<vmem>>, vector<16x256xf32>,
    %c0_22 = arith.constant 0 : index
    %c0_23 = arith.constant 0 : index
    %c0_24 = arith.constant 0 : index
    %29 = vector.load %arg6[%c0_22, %c0_23, %c0_24] : memref<3x12x48xf32, #tpu.memory_space<vmem>>, vector<1x12x48xf32>
    %30 = vector.shape_cast %29 : vector<1x12x48xf32> to vector<12x48xf32>
    %c0_25 = arith.constant 0 : index
    %c0_26 = arith.constant 0 : index
    %31 = vector.load %arg10[%c0_25, %c0_26] : memref<48x288xf32, #tpu.memory_space<vmem>>, vector<48x256xf32>
    %cst_27 = arith.constant dense<0.000000e+00> : vector<12x256xf32>
    %32 = tpu.matmul %30, %31, %cst_27 {dimension_numbers = #tpu.dot_dimension_numbers<[1], [0], [0], [1], [0, 0, 1, 1], [], []>} : vector<12x48xf32>, vector<48x256xf32>, vector<12x256xf32> -> vector<12x256xf32>
    %c1 = arith.constant 1 : index
    %c0_28 = arith.constant 0 : index
    %c0_29 = arith.constant 0 : index
    %33 = vector.load %arg6[%c1, %c0_28, %c0_29] : memref<3x12x48xf32, #tpu.memory_space<vmem>>, vector<1x12x48xf32>
    %34 = vector.shape_cast %33 : vector<1x12x48xf32> to vector<12x48xf32>
    %c0_30 = arith.constant 0 : index
    %c16_31 = arith.constant 16 : index
    %35 = vector.load %arg10[%c0_30, %c16_31] : memref<48x288xf32, #tpu.memory_space<vmem>>, vector<48x256xf32>
    %cst_32 = arith.constant dense<0.000000e+00> : vector<12x256xf32>
    %36 = tpu.matmul %34, %35, %cst_32 {dimension_numbers = #tpu.dot_dimension_numbers<[1], [0], [0], [1], [0, 0, 1, 1], [], []>} : vector<12x48xf32>, vector<48x256xf32>, vector<12x256xf32> -> vector<12x256xf32>
    %37 = arith.addf %32, %36 : vector<12x256xf32>
    %c2 = arith.constant 2 : index
    %c0_33 = arith.constant 0 : index
    %c0_34 = arith.constant 0 : index
    %38 = vector.load %arg6[%c2, %c0_33, %c0_34] : memref<3x12x48xf32, #tpu.memory_space<vmem>>, vector<1x12x48xf32>
    %39 = vector.shape_cast %38 : vector<1x12x48xf32> to vector<12x48xf32>
    %c0_35 = arith.constant 0 : index
    %c32_36 = arith.constant 32 : index
    %40 = vector.load %arg10[%c0_35, %c32_36] : memref<48x288xf32, #tpu.memory_space<vmem>>, vector<48x256xf32>
    %cst_37 = arith.constant dense<0.000000e+00> : vector<12x256xf32>
    %41 = tpu.matmul %39, %40, %cst_37 {dimension_numbers = #tpu.dot_dimension_numbers<[1], [0], [0], [1], [0, 0, 1, 1], [], []>} : vector<12x48xf32>, vector<48x256xf32>, vector<12x256xf32> -> vector<12x256xf32>
    %42 = arith.addf %37, %41 : vector<12x256xf32>
    %c0_38 = arith.constant 0 : index
    %c0_39 = arith.constant 0 : index
    %c0_40 = arith.constant 0 : index
    %43 = vector.load %arg9[%c0_38, %c0_39, %c0_40] : memref<1x12x256xf32, #tpu.memory_space<vmem>>, vector<1x12x256xf32>
    %44 = vector.shape_cast %43 : vector<1x12x256xf32> to vector<12x256xf32>
    %45 = vector.shape_cast %42 : vector<12x256xf32> to vector<1x12x256xf32>
    tpu.vector_store %arg9[%c0_38, %c0_39, %c0_40], %45 {strides = array<i32>} : memref<1x12x256xf32, #tpu.memory_space<vmem>>, vector<1x12x256xf32>,
    return
  }
  func.func @transform_0(%arg0: i32) -> (i32, i32, i32) {
    %c0_i32 = arith.constant 0 : i32
    %c0_i32_0 = arith.constant 0 : i32
    %c0_i32_1 = arith.constant 0 : i32
    return %arg0, %c0_i32, %c0_i32_0 : i32, i32, i32
  }
  func.func @transform_1(%arg0: i32) -> (i32, i32) {
    %c0_i32 = arith.constant 0 : i32
    %c0_i32_0 = arith.constant 0 : i32
    %c0_i32_1 = arith.constant 0 : i32
    return %c0_i32, %c0_i32_0 : i32, i32
  }
  func.func @transform_2(%arg0: i32) -> (i32, i32) {
    %c0_i32 = arith.constant 0 : i32
    %c0_i32_0 = arith.constant 0 : i32
    %c0_i32_1 = arith.constant 0 : i32
    return %c0_i32, %c0_i32_0 : i32, i32
  }
  func.func @transform_3(%arg0: i32) -> (i32, i32) {
    %c0_i32 = arith.constant 0 : i32
    %c0_i32_0 = arith.constant 0 : i32
    %c0_i32_1 = arith.constant 0 : i32
    return %c0_i32, %c0_i32_0 : i32, i32
  }
  func.func @transform_4(%arg0: i32) -> (i32, i32) {
    %c0_i32 = arith.constant 0 : i32
    %c0_i32_0 = arith.constant 0 : i32
    %c0_i32_1 = arith.constant 0 : i32
    return %c0_i32, %c0_i32_0 : i32, i32
  }
  func.func @transform_5(%arg0: i32) -> (i32, i32, i32) {
    %c0_i32 = arith.constant 0 : i32
    %c0_i32_0 = arith.constant 0 : i32
    %c0_i32_1 = arith.constant 0 : i32
    %c0_i32_2 = arith.constant 0 : i32
    return %c0_i32, %c0_i32_0, %c0_i32_1 : i32, i32, i32
  }
  func.func @transform_6(%arg0: i32) -> (i32, i32) {
    %c0_i32 = arith.constant 0 : i32
    %c0_i32_0 = arith.constant 0 : i32
    %c0_i32_1 = arith.constant 0 : i32
    return %c0_i32, %c0_i32_0 : i32, i32
  }
  func.func @transform_7(%arg0: i32) -> (i32, i32) {
    %c0_i32 = arith.constant 0 : i32
    %c0_i32_0 = arith.constant 0 : i32
    %c0_i32_1 = arith.constant 0 : i32
    return %c0_i32, %c0_i32_0 : i32, i32
  }
  func.func @transform_8(%arg0: i32) -> (i32, i32, i32) {
    %c0_i32 = arith.constant 0 : i32
    %c0_i32_0 = arith.constant 0 : i32
    %c0_i32_1 = arith.constant 0 : i32
    return %arg0, %c0_i32, %c0_i32_0 : i32, i32, i32
  }
}

</mosaic_0001>

<llo_original>
// kernel: tpu_custom_call.1
$region0: #{tpu_custom_call.1}
  #allocation0 [shape = 'u32[]', space=smem, size = 0x4, offset = 0x4, fixed_abs, tag = 'smem constant byte address 0x4 - core index']
  #allocation1 [shape = 'u32[144,128]{1,0:T(1,128)}', space=vmem, size = 0x12000, scoped, tag = 'internal scratch']
  #allocation2 [shape = 'f32[48,288]{1,0:T(8,128)}', space=vmem, size = 0x12000, scoped, tag = 'scratch operand']
  %s0 = inlined_call_operand.vmem [shape: f32[2,12,256], index: 0, kind: input, shape index: {}]
  %s1 = inlined_call_operand.vmem [shape: f32[12,1], index: 1, kind: input, shape index: {}]
  %s2 = inlined_call_operand.vmem [shape: f32[12,1], index: 2, kind: input, shape index: {}]
  %s3 = inlined_call_operand.vmem [shape: f32[16,12], index: 3, kind: input, shape index: {}]
  %s4 = inlined_call_operand.vmem [shape: f32[16,1], index: 4, kind: input, shape index: {}]
  %s5 = inlined_call_operand.vmem [shape: f32[3,12,48], index: 5, kind: input, shape index: {}]
  %s6 = inlined_call_operand.vmem [shape: f32[1,256], index: 6, kind: input, shape index: {}]
  %s7 = inlined_call_operand.vmem [shape: f32[1,256], index: 7, kind: input, shape index: {}]
  %s8 = inlined_call_operand.vmem [shape: f32[2,12,256], index: 8, kind: output, shape index: {}]
  %s9 = sld [smem:[#allocation0]]
  $region65: #{tpu_custom_call.1} parent=0
    _
  %s11 = ssub.s32 1, %s9
  %s12 = scalar_select 0, %s11, %s9
  loop: start=0, step=1, limit=4
  $region2: #{tpu_custom_call.1} parent=0 // loop_pre_header
    _
  $region3: #{tpu_custom_call.1} parent=0 // loop_header
    %s14 = sphi 0, %s18
    %p15 = scmp.ge.s32.totalorder %s14, 4
    %s24 = sphi 0, %s26
    %s27 = sphi 0, %s24
    %s28 = sphi 0, %s27
    %s44 = sphi 0, %s28
    %s48 = sphi 0, %s48
    %s50 = sphi 0, %s48
    %s51 = sphi 0, %s50
    %s65 = sphi 0, %s51
    %s69 = sphi 0, %s69
    %s71 = sphi 0, %s69
    %s72 = sphi 0, %s71
    %s86 = sphi 0, %s72
    %s90 = sphi 0, %s90
    %s92 = sphi 0, %s90
    %s93 = sphi 0, %s92
    %s107 = sphi 0, %s93
    %s111 = sphi 0, %s111
    %s113 = sphi 0, %s111
    %s114 = sphi 0, %s113
    %s128 = sphi 0, %s114
    %s132 = sphi 0, %s132
    %s134 = sphi 0, %s132
    %s135 = sphi 0, %s134
    %s149 = sphi 0, %s135
    %s153 = sphi 0, %s153
    %s155 = sphi 0, %s153
    %s156 = sphi 0, %s155
    %s170 = sphi 0, %s156
    %s174 = sphi 0, %s174
    %s176 = sphi 0, %s174
    %s177 = sphi 0, %s176
    %s191 = sphi 0, %s177
    %s197 = sphi 0, %s199
    %s200 = sphi 0, %s197
    %s201 = sphi 0, %s200
    %s217 = sphi 0, %s201
  $region4: #{tpu_custom_call.1} parent=0 // loop_header_branch
    %17 = sbr.rel (%p15) target = $region8
  $region5: #{tpu_custom_call.1} parent=0 // loop_body
    %s19 = ssub.s32 %s14, 1
    %s20 = ssub.s32 %s14, 2
    %s21 = sadd.s32 %s14, 1
    %s22 = ssub.s32 %s14, %s21
    %p23 = scmp.eq.s32.totalorder %s22, 0
    %s25 = sadd.s32 %s24, 1
    %s26 = scalar_select %p23, %s24, %s25
    %p29 = pneg %p23
    %p30 = scmp.eq.s32.totalorder %s14, 1
    %p31 = por %p29, %p30
    %p32 = scmp.ne.s32.totalorder %s24, %s27
    %p33 = scmp.eq.s32.totalorder %s14, 0
    %p34 = por %p32, %p33
    %p35 = scmp.ne.s32.totalorder %s24, %s27
    %p36 = scmp.eq.s32.totalorder %s19, 1
    %p37 = por %p35, %p36
    %p38 = scmp.ne.s32.totalorder %s27, %s28
    %p39 = scmp.eq.s32.totalorder %s19, 0
    %p40 = por %p38, %p39
    %p41 = scmp.ne.s32.totalorder %s27, %s28
    %p42 = scmp.eq.s32.totalorder %s20, 1
    %p43 = por %p41, %p42
    %p45 = scmp.ne.s32.totalorder %s28, %s44
    %p46 = scmp.eq.s32.totalorder %s20, 0
    %p47 = por %p45, %p46
    %s49 = sadd.s32 %s48, 1
    %p52 = scmp.eq.s32.totalorder %s14, 1
    %p53 = scmp.ne.s32.totalorder %s48, %s50
    %p54 = scmp.eq.s32.totalorder %s14, 0
    %p55 = por %p53, %p54
    %p56 = scmp.ne.s32.totalorder %s48, %s50
    %p57 = scmp.eq.s32.totalorder %s19, 1
    %p58 = por %p56, %p57
    %p59 = scmp.ne.s32.totalorder %s50, %s51
    %p60 = scmp.eq.s32.totalorder %s19, 0
    %p61 = por %p59, %p60
    %p62 = scmp.ne.s32.totalorder %s50, %s51
    %p63 = scmp.eq.s32.totalorder %s20, 1
    %p64 = por %p62, %p63
    %p66 = scmp.ne.s32.totalorder %s51, %s65
    %p67 = scmp.eq.s32.totalorder %s20, 0
    %p68 = por %p66, %p67
    %s70 = sadd.s32 %s69, 1
    %p73 = scmp.eq.s32.totalorder %s14, 1
    %p74 = scmp.ne.s32.totalorder %s69, %s71
    %p75 = scmp.eq.s32.totalorder %s14, 0
    %p76 = por %p74, %p75
    %p77 = scmp.ne.s32.totalorder %s69, %s71
    %p78 = scmp.eq.s32.totalorder %s19, 1
    %p79 = por %p77, %p78
    %p80 = scmp.ne.s32.totalorder %s71, %s72
    %p81 = scmp.eq.s32.totalorder %s19, 0
    %p82 = por %p80, %p81
    %p83 = scmp.ne.s32.totalorder %s71, %s72
    %p84 = scmp.eq.s32.totalorder %s20, 1
    %p85 = por %p83, %p84
    %p87 = scmp.ne.s32.totalorder %s72, %s86
    %p88 = scmp.eq.s32.totalorder %s20, 0
    %p89 = por %p87, %p88
    %s91 = sadd.s32 %s90, 1
    %p94 = scmp.eq.s32.totalorder %s14, 1
    %p95 = scmp.ne.s32.totalorder %s90, %s92
    %p96 = scmp.eq.s32.totalorder %s14, 0
    %p97 = por %p95, %p96
    %p98 = scmp.ne.s32.totalorder %s90, %s92
    %p99 = scmp.eq.s32.totalorder %s19, 1
    %p100 = por %p98, %p99
    %p101 = scmp.ne.s32.totalorder %s92, %s93
    %p102 = scmp.eq.s32.totalorder %s19, 0
    %p103 = por %p101, %p102
    %p104 = scmp.ne.s32.totalorder %s92, %s93
    %p105 = scmp.eq.s32.totalorder %s20, 1
    %p106 = por %p104, %p105
    %p108 = scmp.ne.s32.totalorder %s93, %s107
    %p109 = scmp.eq.s32.totalorder %s20, 0
    %p110 = por %p108, %p109
    %s112 = sadd.s32 %s111, 1
    %p115 = scmp.eq.s32.totalorder %s14, 1
    %p116 = scmp.ne.s32.totalorder %s111, %s113
    %p117 = scmp.eq.s32.totalorder %s14, 0
    %p118 = por %p116, %p117
    %p119 = scmp.ne.s32.totalorder %s111, %s113
    %p120 = scmp.eq.s32.totalorder %s19, 1
    %p121 = por %p119, %p120
    %p122 = scmp.ne.s32.totalorder %s113, %s114
    %p123 = scmp.eq.s32.totalorder %s19, 0
    %p124 = por %p122, %p123
    %p125 = scmp.ne.s32.totalorder %s113, %s114
    %p126 = scmp.eq.s32.totalorder %s20, 1
    %p127 = por %p125, %p126
    %p129 = scmp.ne.s32.totalorder %s114, %s128
    %p130 = scmp.eq.s32.totalorder %s20, 0
    %p131 = por %p129, %p130
    %s133 = sadd.s32 %s132, 1
    %p136 = scmp.eq.s32.totalorder %s14, 1
    %p137 = scmp.ne.s32.totalorder %s132, %s134
    %p138 = scmp.eq.s32.totalorder %s14, 0
    %p139 = por %p137, %p138
    %p140 = scmp.ne.s32.totalorder %s132, %s134
    %p141 = scmp.eq.s32.totalorder %s19, 1
    %p142 = por %p140, %p141
    %p143 = scmp.ne.s32.totalorder %s134, %s135
    %p144 = scmp.eq.s32.totalorder %s19, 0
    %p145 = por %p143, %p144
    %p146 = scmp.ne.s32.totalorder %s134, %s135
    %p147 = scmp.eq.s32.totalorder %s20, 1
    %p148 = por %p146, %p147
    %p150 = scmp.ne.s32.totalorder %s135, %s149
    %p151 = scmp.eq.s32.totalorder %s20, 0
    %p152 = por %p150, %p151
    %s154 = sadd.s32 %s153, 1
    %p157 = scmp.eq.s32.totalorder %s14, 1
    %p158 = scmp.ne.s32.totalorder %s153, %s155
    %p159 = scmp.eq.s32.totalorder %s14, 0
    %p160 = por %p158, %p159
    %p161 = scmp.ne.s32.totalorder %s153, %s155
    %p162 = scmp.eq.s32.totalorder %s19, 1
    %p163 = por %p161, %p162
    %p164 = scmp.ne.s32.totalorder %s155, %s156
    %p165 = scmp.eq.s32.totalorder %s19, 0
    %p166 = por %p164, %p165
    %p167 = scmp.ne.s32.totalorder %s155, %s156
    %p168 = scmp.eq.s32.totalorder %s20, 1
    %p169 = por %p167, %p168
    %p171 = scmp.ne.s32.totalorder %s156, %s170
    %p172 = scmp.eq.s32.totalorder %s20, 0
    %p173 = por %p171, %p172
    %s175 = sadd.s32 %s174, 1
    %p178 = scmp.eq.s32.totalorder %s14, 1
    %p179 = scmp.ne.s32.totalorder %s174, %s176
    %p180 = scmp.eq.s32.totalorder %s14, 0
    %p181 = por %p179, %p180
    %p182 = scmp.ne.s32.totalorder %s174, %s176
    %p183 = scmp.eq.s32.totalorder %s19, 1
    %p184 = por %p182, %p183
    %p185 = scmp.ne.s32.totalorder %s176, %s177
    %p186 = scmp.eq.s32.totalorder %s19, 0
    %p187 = por %p185, %p186
    %p188 = scmp.ne.s32.totalorder %s176, %s177
    %p189 = scmp.eq.s32.totalorder %s20, 1
    %p190 = por %p188, %p189
    %p192 = scmp.ne.s32.totalorder %s177, %s191
    %p193 = scmp.eq.s32.totalorder %s20, 0
    %p194 = por %p192, %p193
    %s195 = ssub.s32 %s14, %s21
    %p196 = scmp.eq.s32.totalorder %s195, 0
    %s198 = sadd.s32 %s197, 1
    %s199 = scalar_select %p196, %s197, %s198
    %p202 = pneg %p196
    %p203 = scmp.eq.s32.totalorder %s14, 1
    %p204 = por %p202, %p203
    %p205 = scmp.ne.s32.totalorder %s197, %s200
    %p206 = scmp.eq.s32.totalorder %s14, 0
    %p207 = por %p205, %p206
    %p208 = scmp.ne.s32.totalorder %s197, %s200
    %p209 = scmp.eq.s32.totalorder %s19, 1
    %p210 = por %p208, %p209
    %p211 = scmp.ne.s32.totalorder %s200, %s201
    %p212 = scmp.eq.s32.totalorder %s19, 0
    %p213 = por %p211, %p212
    %p214 = scmp.ne.s32.totalorder %s200, %s201
    %p215 = scmp.eq.s32.totalorder %s20, 1
    %p216 = por %p214, %p215
    %p218 = scmp.ne.s32.totalorder %s201, %s217
    %p219 = scmp.eq.s32.totalorder %s20, 0
    %p220 = por %p218, %p219
    %p221 = scmp.le.s32.totalorder 1, %s14
    %p222 = scmp.lt.s32.totalorder %s14, 3
    %p223 = pnand %p221, %p222
    %p224 = pneg %p223
    // Predicated region
    $region9: #{tpu_custom_call.1} parent=5 // pred_check
      _
    $region10: #{tpu_custom_call.1} parent=5 // pred_check_branch
      %226 = sbr.rel (%p223) target = $region12
    $region11: #{tpu_custom_call.1} parent=5 // pred_region
      %s227 = ssub.s32 %s14, 1
      // Predicated region
      $region13: #{tpu_custom_call.1} parent=11 // pred_check
        %p228 = pneg %p61
      $region14: #{tpu_custom_call.1} parent=11 // pred_check_branch
        %230 = sbr.rel (%p228) target = $region16
      $region15: #{tpu_custom_call.1} parent=11 // pred_region
        _
      $region16: #{tpu_custom_call.1} parent=11 // pred_fallthru
        _
      // Predicated region
      $region17: #{tpu_custom_call.1} parent=11 // pred_check
        %p231 = pneg %p82
      $region18: #{tpu_custom_call.1} parent=11 // pred_check_branch
        %233 = sbr.rel (%p231) target = $region20
      $region19: #{tpu_custom_call.1} parent=11 // pred_region
        _
      $region20: #{tpu_custom_call.1} parent=11 // pred_fallthru
        _
      // Predicated region
      $region21: #{tpu_custom_call.1} parent=11 // pred_check
        %p234 = pneg %p103
      $region22: #{tpu_custom_call.1} parent=11 // pred_check_branch
        %236 = sbr.rel (%p234) target = $region24
      $region23: #{tpu_custom_call.1} parent=11 // pred_region
        _
      $region24: #{tpu_custom_call.1} parent=11 // pred_fallthru
        _
      // Predicated region
      $region25: #{tpu_custom_call.1} parent=11 // pred_check
        %p237 = pneg %p124
      $region26: #{tpu_custom_call.1} parent=11 // pred_check_branch
        %239 = sbr.rel (%p237) target = $region28
      $region27: #{tpu_custom_call.1} parent=11 // pred_region
        _
      $region28: #{tpu_custom_call.1} parent=11 // pred_fallthru
        _
      // Predicated region
      $region29: #{tpu_custom_call.1} parent=11 // pred_check
        %p240 = pneg %p145
      $region30: #{tpu_custom_call.1} parent=11 // pred_check_branch
        %242 = sbr.rel (%p240) target = $region32
      $region31: #{tpu_custom_call.1} parent=11 // pred_region
        _
      $region32: #{tpu_custom_call.1} parent=11 // pred_fallthru
        _
      // Predicated region
      $region33: #{tpu_custom_call.1} parent=11 // pred_check
        %p243 = pneg %p166
      $region34: #{tpu_custom_call.1} parent=11 // pred_check_branch
        %245 = sbr.rel (%p243) target = $region36
      $region35: #{tpu_custom_call.1} parent=11 // pred_region
        _
      $region36: #{tpu_custom_call.1} parent=11 // pred_fallthru
        _
      // Predicated region
      $region37: #{tpu_custom_call.1} parent=11 // pred_check
        %p246 = pneg %p187
      $region38: #{tpu_custom_call.1} parent=11 // pred_check_branch
        %248 = sbr.rel (%p246) target = $region40
      $region39: #{tpu_custom_call.1} parent=11 // pred_region
        _
      $region40: #{tpu_custom_call.1} parent=11 // pred_fallthru
        _
    $region12: #{tpu_custom_call.1} parent=5 // pred_fallthru
      _
    %p249 = scmp.lt.s32.totalorder %s14, 2
    // Predicated region
    $region41: #{tpu_custom_call.1} parent=5 // pred_check
      %p250 = pneg %p249
    $region42: #{tpu_custom_call.1} parent=5 // pred_check_branch
      %252 = sbr.rel (%p250) target = $region44
    $region43: #{tpu_custom_call.1} parent=5 // pred_region
      // Predicated region
      $region45: #{tpu_custom_call.1} parent=43 // pred_check
        %p253 = pneg %p34
      $region46: #{tpu_custom_call.1} parent=43 // pred_check_branch
        %255 = sbr.rel (%p253) target = $region48
      $region47: #{tpu_custom_call.1} parent=43 // pred_region
        %p256 = scmp.lt.s32.totalorder %s14, 1
        %s257 = scalar_select %p256, %s14, 1
        %s258 = smul.addr %s257, 4
        %s259 = smul.addr %s258, 8
        %s260 = scalar_lea.vmem %s0, %s259
      $region48: #{tpu_custom_call.1} parent=43 // pred_fallthru
        _
    $region44: #{tpu_custom_call.1} parent=5 // pred_fallthru
      _
    %p261 = scmp.le.s32.totalorder 1, %s14
    %p262 = scmp.lt.s32.totalorder %s14, 3
    %p263 = pnand %p261, %p262
    %p264 = pneg %p263
    // Predicated region
    $region49: #{tpu_custom_call.1} parent=5 // pred_check
      _
    $region50: #{tpu_custom_call.1} parent=5 // pred_check_branch
      %266 = sbr.rel (%p263) target = $region52
    $region51: #{tpu_custom_call.1} parent=5 // pred_region
      %s267 = ssub.s32 %s14, 1
      %p268 = scmp.lt.s32.totalorder %s19, 1
      %s269 = scalar_select %p268, %s19, 1
      %s270 = smul.addr %s269, 4
      %s271 = smul.addr %s270, 8
      %s272 = scalar_lea.vmem %s0, %s271
      %p273 = pneg %p40
      %p274 = pneg %p37
      %p275 = pneg %p61
      %p276 = pneg %p58
      %p277 = pneg %p82
      %p278 = pneg %p79
      %p279 = pneg %p103
      %p280 = pneg %p100
      %p281 = pneg %p124
      %p282 = pneg %p121
      %p283 = pneg %p145
      %p284 = pneg %p142
      %p285 = pneg %p166
      %p286 = pneg %p163
      %p287 = pneg %p187
      %p288 = pneg %p184
      %p289 = pneg %p213
      %p290 = pneg %p210
      %p291 = scmp.lt.s32.totalorder %s19, 1
      %s292 = scalar_select %p291, %s19, 1
      %s293 = smul.addr %s292, 4
      %s294 = smul.addr %s293, 8
      %s295 = scalar_lea.vmem %s8, %s294
      %p296 = scmp.lt.s32.totalorder %s19, 1
      %s297 = scalar_select %p296, %s19, 1
      %s298 = smul.addr %s297, 4
      %s299 = smul.addr %s298, 8
      %s300 = scalar_lea.vmem %s0, %s299
      %p301 = scmp.lt.s32.totalorder %s19, 1
      %s302 = scalar_select %p301, %s19, 1
      %s303 = smul.addr %s302, 4
      %s304 = smul.addr %s303, 8
      %s305 = scalar_lea.vmem %s8, %s304
      %v306 = vld [vmem:[%s300] sm:$0xff]
      %v307 = vld [vmem:[%s300 + $0x8] sm:$0xff]
      %v308 = vld [vmem:[%s300 + $0x10] sm:$0xf]
      %v309 = vld [vmem:[%s300 + $0x18] sm:$0xf]
      %v310 = vld [vmem:[%s1] sm:$0xff]
      %v311 = vld [vmem:[%s1 + $0x8] sm:$0xf]
      %313 = vset.pattern.permute.xlu0 0
      %314 = vperm.xlu0 %313, %v310
      %v315 = vpop.permute.xlu0 %314
      %318 = vset.pattern.permute.xlu0 0
      %319 = vperm.xlu0 %318, %v311
      %v320 = vpop.permute.xlu0 %319
      %v322 = vmul.f32 %v306, %v315
      %v323 = vmul.f32 %v307, %v315
      %v324 = vmul.f32 %v308, %v320
      %v325 = vmul.f32 %v309, %v320
      %v326 = vld [vmem:[%s2] sm:$0xff]
      %v327 = vld [vmem:[%s2 + $0x8] sm:$0xf]
      %329 = vset.pattern.permute.xlu0 0
      %330 = vperm.xlu0 %329, %v326
      %v331 = vpop.permute.xlu0 %330
      %334 = vset.pattern.permute.xlu0 0
      %335 = vperm.xlu0 %334, %v327
      %v336 = vpop.permute.xlu0 %335
      %v338 = vadd.f32 %v322, %v331
      %v339 = vadd.f32 %v323, %v331
      %v340 = vadd.f32 %v324, %v336
      %v341 = vadd.f32 %v325, %v336
      %v342 = vmax.f32 %v338, 0.0
      %v343 = vmax.f32 %v339, 0.0
      %v344 = vmax.f32 %v340, 0.0
      %v345 = vmax.f32 %v341, 0.0
      %v346 = vld [vmem:[%s3] sm:$0xff]
      %v347 = vld [vmem:[%s3 + $0x8] sm:$0xff]
      %v348 = vld [vmem:[%s4] sm:$0xff]
      %v349 = vld [vmem:[%s4 + $0x8] sm:$0xff]
      %351 = vset.pattern.permute.xlu0 0
      %352 = vperm.xlu0 %351, %v348
      %v353 = vpop.permute.xlu0 %352
      %356 = vset.pattern.permute.xlu0 0
      %357 = vperm.xlu0 %356, %v349
      %v358 = vpop.permute.xlu0 %357
      %vm360 = vcmask 97280
      %v362 = vsel %vm360, %v346, 0
      %v365 = vsel %vm360, %v347, 0
      %vm367 = vcmask 1043456
      %v369 = vsel %vm367, %v344, 0
      %v372 = vsel %vm367, %v345, 0
      %374 = vmatprep.subr.mxu0 %v343
      %375 = vmatpush1.msra.mxu0 %v342
      %376 = vmatprep.subr.mxu0 %v372
      %377 = vmatpush1.msra.mxu0 %v369
      %378 = vmatprep.subr.mxu0 0.0
      %379 = vmatpush1.msra.mxu0 0.0
      %380 = vmatprep.subr.mxu0 0.0
      %381 = vmatpush1.msra.mxu0 0.0
      %382 = vmatprep.subr.mxu0 0.0
      %383 = vmatpush1.msra.mxu0 0.0
      %384 = vmatprep.subr.mxu0 0.0
      %385 = vmatpush1.msra.mxu0 0.0
      %386 = vmatprep.subr.mxu0 0.0
      %387 = vmatpush1.msra.mxu0 0.0
      %388 = vmatprep.subr.mxu0 0.0
      %389 = vmatpush1.msra.mxu0 0.0
      %390 = vmatprep.subr.mxu0 0.0
      %391 = vmatpush1.msra.mxu0 0.0
      %392 = vmatprep.subr.mxu0 0.0
      %393 = vmatpush1.msra.mxu0 0.0
      %394 = vmatprep.subr.mxu0 0.0
      %395 = vmatpush1.msra.mxu0 0.0
      %396 = vmatprep.subr.mxu0 0.0
      %397 = vmatpush1.msra.mxu0 0.0
      %398 = vmatprep.subr.mxu0 0.0
      %399 = vmatpush1.msra.mxu0 0.0
      %400 = vmatprep.subr.mxu0 0.0
      %401 = vmatpush1.msra.mxu0 0.0
      %402 = vmatprep.subr.mxu0 0.0
      %403 = vmatpush1.msra.mxu0 0.0
      %404 = vmatprep.subr.mxu0 0.0
      %405 = vmatpush1.msra.mxu0 0.0
      %406 = vmatprep.subr.mxu0 0.0
      %407 = vmatpush1.msra.mxu0 0.0
      %408 = vmatprep.subr.mxu0 0.0
      %409 = vmatpush1.msra.mxu0 0.0
      %410 = vmatprep.subr.mxu0 0.0
      %411 = vmatpush1.msra.mxu0 0.0
      %412 = vmatprep.subr.mxu0 0.0
      %413 = vmatpush1.msra.mxu0 0.0
      %414 = vmatprep.subr.mxu0 0.0
      %415 = vmatpush1.msra.mxu0 0.0
      %416 = vmatprep.subr.mxu0 0.0
      %417 = vmatpush1.msra.mxu0 0.0
      %418 = vmatprep.subr.mxu0 0.0
      %419 = vmatpush1.msra.mxu0 0.0
      %420 = vmatprep.subr.mxu0 0.0
      %421 = vmatpush1.msra.mxu0 0.0
      %422 = vmatprep.subr.mxu0 0.0
      %423 = vmatpush1.msra.mxu0 0.0
      %424 = vmatprep.subr.mxu0 0.0
      %425 = vmatpush1.msra.mxu0 0.0
      %426 = vmatprep.subr.mxu0 0.0
      %427 = vmatpush1.msra.mxu0 0.0
      %428 = vmatprep.subr.mxu0 0.0
      %429 = vmatpush1.msra.mxu0 0.0
      %430 = vmatprep.subr.mxu0 0.0
      %431 = vmatpush1.msra.mxu0 0.0
      %432 = vmatprep.subr.mxu0 0.0
      %433 = vmatpush1.msra.mxu0 0.0
      %434 = vmatprep.subr.mxu0 0.0
      %435 = vmatpush1.msra.mxu0 0.0
      %436 = vmatprep.subr.mxu0 0.0
      %437 = vmatpush1.msra.mxu0 0.0
      %438 = vmatprep.mubr.f32.mxu0 0.0
      %439 = vmatmul.mubr.f32.gmra.mrb[0].mxu0 %v362
      %v440 = vpop.f32.mrb[0].mxu0
      %v441 = vadd.f32 %v353, %v440
      %v442 = vpop.f32.mrb[0].mxu0
      %v443 = vadd.f32 %v353, %v442
      %444 = vmatprep.mubr.f32.mxu0 0.0
      %445 = vmatmul.mubr.f32.gmra.mrb[0].mxu0 %v365
      %v446 = vpop.f32.mrb[0].mxu0
      %v447 = vadd.f32 %v358, %v446
      %v448 = vpop.f32.mrb[0].mxu0
      %v449 = vadd.f32 %v358, %v448
      %450 = vdwg.mxu0
      %v451 = vmax.f32 %v441, 0.0
      %v452 = vmax.f32 %v443, 0.0
      %v453 = vmax.f32 %v447, 0.0
      %v454 = vmax.f32 %v449, 0.0
      %vm455 = vcmask 138240
      %456 = vst.msk [vmem:[#allocation2] sm:$0xff] %vm455, 0.0
      %457 = vst.msk [vmem:[#allocation2 + $0x18] sm:$0xff] %vm455, 0.0
      %458 = vst.msk [vmem:[#allocation2 + $0x30] sm:$0xff] %vm455, 0.0
      %459 = vst.msk [vmem:[#allocation2 + $0x48] sm:$0xff] %vm455, 0.0
      %460 = vst.msk [vmem:[#allocation2 + $0x60] sm:$0xff] %vm455, 0.0
      %461 = vst.msk [vmem:[#allocation2 + $0x78] sm:$0xff] %vm455, 0.0
      %vm462 = vcmask 261240
      %463 = vst.msk [vmem:[#allocation2 + $0x10] sm:$0xff] %vm462, 0.0
      %464 = vst.msk [vmem:[#allocation2 + $0x28] sm:$0xff] %vm462, 0.0
      %465 = vst.msk [vmem:[#allocation2 + $0x40] sm:$0xff] %vm462, 0.0
      %466 = vst.msk [vmem:[#allocation2 + $0x58] sm:$0xff] %vm462, 0.0
      %467 = vst.msk [vmem:[#allocation2 + $0x70] sm:$0xff] %vm462, 0.0
      %468 = vst.msk [vmem:[#allocation2 + $0x88] sm:$0xff] %vm462, 0.0
      %v469 = vld [vmem:[%s6] sm:$0x3]
      %v471 = vlaneseq
      %v472 = vshrl.u32 %v471, 7
      %v473 = vsub.s32 0, %v472
      %v474 = vrot.slane %v469, %v473
      %v475 = vlaneseq
      %v476 = vshrl.u32 %v475, 7
      %v477 = vsub.s32 1, %v476
      %v478 = vrot.slane %v469, %v477
      %v481 = vmul.f32 %v451, %v474
      %v482 = vmul.f32 %v452, %v478
      %v483 = vmul.f32 %v453, %v474
      %v484 = vmul.f32 %v454, %v478
      %489 = vrot.lane.b32.xlu0 %v481, 17
      %v490 = vpop.permute.xlu0 %489
      %491 = vrot.lane.b32.xlu0 %v482, 17
      %v492 = vpop.permute.xlu0 %491
      %493 = vrot.lane.b32.xlu0 %v483, 17
      %v494 = vpop.permute.xlu0 %493
      %495 = vrot.lane.b32.xlu0 %v484, 17
      %v496 = vpop.permute.xlu0 %495
      %v497 = vsel %vm455, %v490, %v492
      %v498 = vsel %vm455, %v494, %v496
      %vm505 = vcmask 1047688
      %506 = vst.msk [vmem:[#allocation2] sm:$0xff] %vm505, %v490
      %507 = vst [vmem:[#allocation2 + $0x8] sm:$0xff] %v497
      %508 = vst.msk [vmem:[#allocation2 + $0x10] sm:$0xff] %vm455, %v492
      %509 = vst.msk [vmem:[#allocation2 + $0x18] sm:$0xff] %vm505, %v494
      %510 = vst [vmem:[#allocation2 + $0x20] sm:$0xff] %v498
      %511 = vst.msk [vmem:[#allocation2 + $0x28] sm:$0xff] %vm455, %v496
      %516 = vrot.lane.b32.xlu0 %v451, 16
      %v517 = vpop.permute.xlu0 %516
      %518 = vrot.lane.b32.xlu0 %v452, 16
      %v519 = vpop.permute.xlu0 %518
      %520 = vrot.lane.b32.xlu0 %v453, 16
      %v521 = vpop.permute.xlu0 %520
      %522 = vrot.lane.b32.xlu0 %v454, 16
      %v523 = vpop.permute.xlu0 %522
      %vm524 = vcmask 130048
      %v525 = vsel %vm524, %v517, %v519
      %v526 = vsel %vm524, %v521, %v523
      %vm533 = vcmask 1047680
      %534 = vst.msk [vmem:[#allocation2 + $0x30] sm:$0xff] %vm533, %v517
      %535 = vst [vmem:[#allocation2 + $0x38] sm:$0xff] %v525
      %536 = vst.msk [vmem:[#allocation2 + $0x40] sm:$0xff] %vm524, %v519
      %537 = vst.msk [vmem:[#allocation2 + $0x48] sm:$0xff] %vm533, %v521
      %538 = vst [vmem:[#allocation2 + $0x50] sm:$0xff] %v526
      %539 = vst.msk [vmem:[#allocation2 + $0x58] sm:$0xff] %vm524, %v523
      %v540 = vld [vmem:[%s7] sm:$0x3]
      %v542 = vlaneseq
      %v543 = vshrl.u32 %v542, 7
      %v544 = vsub.s32 0, %v543
      %v545 = vrot.slane %v540, %v544
      %v546 = vlaneseq
      %v547 = vshrl.u32 %v546, 7
      %v548 = vsub.s32 1, %v547
      %v549 = vrot.slane %v540, %v548
      %v552 = vmul.f32 %v451, %v545
      %v553 = vmul.f32 %v452, %v549
      %v554 = vmul.f32 %v453, %v545
      %v555 = vmul.f32 %v454, %v549
      %560 = vrot.lane.b32.xlu0 %v552, 15
      %v561 = vpop.permute.xlu0 %560
      %562 = vrot.lane.b32.xlu0 %v553, 15
      %v563 = vpop.permute.xlu0 %562
      %564 = vrot.lane.b32.xlu0 %v554, 15
      %v565 = vpop.permute.xlu0 %564
      %566 = vrot.lane.b32.xlu0 %v555, 15
      %v567 = vpop.permute.xlu0 %566
      %vm568 = vcmask 121856
      %v569 = vsel %vm568, %v561, %v563
      %v570 = vsel %vm568, %v565, %v567
      %vm577 = vcmask 1047672
      %578 = vst.msk [vmem:[#allocation2 + $0x60] sm:$0xff] %vm577, %v561
      %579 = vst [vmem:[#allocation2 + $0x68] sm:$0xff] %v569
      %580 = vst.msk [vmem:[#allocation2 + $0x70] sm:$0xff] %vm568, %v563
      %581 = vst.msk [vmem:[#allocation2 + $0x78] sm:$0xff] %vm577, %v565
      %582 = vst [vmem:[#allocation2 + $0x80] sm:$0xff] %v570
      %583 = vst.msk [vmem:[#allocation2 + $0x88] sm:$0xff] %vm568, %v567
      %v584 = vld [vmem:[%s5] sm:$0xff]
      %v585 = vld [vmem:[%s5 + $0x8] sm:$0xf]
      %v586 = vld [vmem:[#allocation2] sm:$0xff]
      %v587 = vld [vmem:[#allocation2 + $0x8] sm:$0xff]
      %v588 = vld [vmem:[#allocation2 + $0x18] sm:$0xff]
      %v589 = vld [vmem:[#allocation2 + $0x20] sm:$0xff]
      %v590 = vld [vmem:[#allocation2 + $0x30] sm:$0xff]
      %v591 = vld [vmem:[#allocation2 + $0x38] sm:$0xff]
      %v592 = vld [vmem:[#allocation2 + $0x48] sm:$0xff]
      %v593 = vld [vmem:[#allocation2 + $0x50] sm:$0xff]
      %v594 = vld [vmem:[#allocation2 + $0x60] sm:$0xff]
      %v595 = vld [vmem:[#allocation2 + $0x68] sm:$0xff]
      %v596 = vld [vmem:[#allocation2 + $0x78] sm:$0xff]
      %v597 = vld [vmem:[#allocation2 + $0x80] sm:$0xff]
      %s598 = scalar_lea.vmem %s5, 16
      %v599 = vld [vmem:[%s598] sm:$0xff]
      %v600 = vld [vmem:[%s598 + $0x8] sm:$0xf]
      %v601 = vld [vmem:[#allocation2 + $0x10] sm:$0xff]
      %v602 = vld [vmem:[#allocation2 + $0x28] sm:$0xff]
      %v603 = vld [vmem:[#allocation2 + $0x40] sm:$0xff]
      %v604 = vld [vmem:[#allocation2 + $0x58] sm:$0xff]
      %v605 = vld [vmem:[#allocation2 + $0x70] sm:$0xff]
      %v606 = vld [vmem:[#allocation2 + $0x88] sm:$0xff]
      %625 = vrot.lane.b32.xlu0 %v586, 112
      %v626 = vpop.permute.xlu0 %625
      %627 = vrot.lane.b32.xlu0 %v587, 112
      %v628 = vpop.permute.xlu0 %627
      %629 = vrot.lane.b32.xlu0 %v601, 112
      %v630 = vpop.permute.xlu0 %629
      %631 = vrot.lane.b32.xlu0 %v588, 112
      %v632 = vpop.permute.xlu0 %631
      %633 = vrot.lane.b32.xlu0 %v589, 112
      %v634 = vpop.permute.xlu0 %633
      %635 = vrot.lane.b32.xlu0 %v602, 112
      %v636 = vpop.permute.xlu0 %635
      %637 = vrot.lane.b32.xlu0 %v590, 112
      %v638 = vpop.permute.xlu0 %637
      %639 = vrot.lane.b32.xlu0 %v591, 112
      %v640 = vpop.permute.xlu0 %639
      %641 = vrot.lane.b32.xlu0 %v603, 112
      %v642 = vpop.permute.xlu0 %641
      %643 = vrot.lane.b32.xlu0 %v592, 112
      %v644 = vpop.permute.xlu0 %643
      %645 = vrot.lane.b32.xlu0 %v593, 112
      %v646 = vpop.permute.xlu0 %645
      %647 = vrot.lane.b32.xlu0 %v604, 112
      %v648 = vpop.permute.xlu0 %647
      %649 = vrot.lane.b32.xlu0 %v594, 112
      %v650 = vpop.permute.xlu0 %649
      %651 = vrot.lane.b32.xlu0 %v595, 112
      %v652 = vpop.permute.xlu0 %651
      %653 = vrot.lane.b32.xlu0 %v605, 112
      %v654 = vpop.permute.xlu0 %653
      %655 = vrot.lane.b32.xlu0 %v596, 112
      %v656 = vpop.permute.xlu0 %655
      %657 = vrot.lane.b32.xlu0 %v597, 112
      %v658 = vpop.permute.xlu0 %657
      %659 = vrot.lane.b32.xlu0 %v606, 112
      %v660 = vpop.permute.xlu0 %659
      %vm661 = vcmask 916480
      %v662 = vsel %vm661, %v626, %v628
      %v663 = vsel %vm661, %v628, %v630
      %v664 = vsel %vm661, %v632, %v634
      %v665 = vsel %vm661, %v634, %v636
      %v666 = vsel %vm661, %v638, %v640
      %v667 = vsel %vm661, %v640, %v642
      %v668 = vsel %vm661, %v644, %v646
      %v669 = vsel %vm661, %v646, %v648
      %v670 = vsel %vm661, %v650, %v652
      %v671 = vsel %vm661, %v652, %v654
      %v672 = vsel %vm661, %v656, %v658
      %v673 = vsel %vm661, %v658, %v660
      %vm686 = vcmask 392192
      %v688 = vsel %vm686, %v599, 0
      %v691 = vsel %vm686, %v600, 0
      %693 = vmatprep.subr.mxu0 %v663
      %694 = vmatpush1.msra.mxu0 %v662
      %695 = vmatprep.subr.mxu0 %v665
      %696 = vmatpush1.msra.mxu0 %v664
      %697 = vmatprep.subr.mxu0 %v667
      %698 = vmatpush1.msra.mxu0 %v666
      %699 = vmatprep.subr.mxu0 %v669
      %700 = vmatpush1.msra.mxu0 %v668
      %701 = vmatprep.subr.mxu0 %v671
      %702 = vmatpush1.msra.mxu0 %v670
      %703 = vmatprep.subr.mxu0 %v673
      %704 = vmatpush1.msra.mxu0 %v672
      %705 = vmatprep.subr.mxu0 0.0
      %706 = vmatpush1.msra.mxu0 0.0
      %707 = vmatprep.subr.mxu0 0.0
      %708 = vmatpush1.msra.mxu0 0.0
      %709 = vmatprep.subr.mxu0 0.0
      %710 = vmatpush1.msra.mxu0 0.0
      %711 = vmatprep.subr.mxu0 0.0
      %712 = vmatpush1.msra.mxu0 0.0
      %713 = vmatprep.subr.mxu0 0.0
      %714 = vmatpush1.msra.mxu0 0.0
      %715 = vmatprep.subr.mxu0 0.0
      %716 = vmatpush1.msra.mxu0 0.0
      %717 = vmatprep.subr.mxu0 0.0
      %718 = vmatpush1.msra.mxu0 0.0
      %719 = vmatprep.subr.mxu0 0.0
      %720 = vmatpush1.msra.mxu0 0.0
      %721 = vmatprep.subr.mxu0 0.0
      %722 = vmatpush1.msra.mxu0 0.0
      %723 = vmatprep.subr.mxu0 0.0
      %724 = vmatpush1.msra.mxu0 0.0
      %725 = vmatprep.subr.mxu0 0.0
      %726 = vmatpush1.msra.mxu0 0.0
      %727 = vmatprep.subr.mxu0 0.0
      %728 = vmatpush1.msra.mxu0 0.0
      %729 = vmatprep.subr.mxu0 0.0
      %730 = vmatpush1.msra.mxu0 0.0
      %731 = vmatprep.subr.mxu0 0.0
      %732 = vmatpush1.msra.mxu0 0.0
      %733 = vmatprep.subr.mxu0 0.0
      %734 = vmatpush1.msra.mxu0 0.0
      %735 = vmatprep.subr.mxu0 0.0
      %736 = vmatpush1.msra.mxu0 0.0
      %737 = vmatprep.subr.mxu0 0.0
      %738 = vmatpush1.msra.mxu0 0.0
      %739 = vmatprep.subr.mxu0 0.0
      %740 = vmatpush1.msra.mxu0 0.0
      %741 = vmatprep.subr.mxu0 0.0
      %742 = vmatpush1.msra.mxu0 0.0
      %743 = vmatprep.subr.mxu0 0.0
      %744 = vmatpush1.msra.mxu0 0.0
      %745 = vmatprep.subr.mxu0 0.0
      %746 = vmatpush1.msra.mxu0 0.0
      %747 = vmatprep.subr.mxu0 0.0
      %748 = vmatpush1.msra.mxu0 0.0
      %749 = vmatprep.subr.mxu0 0.0
      %750 = vmatpush1.msra.mxu0 0.0
      %751 = vmatprep.subr.mxu0 0.0
      %752 = vmatpush1.msra.mxu0 0.0
      %753 = vmatprep.subr.mxu0 0.0
      %754 = vmatpush1.msra.mxu0 0.0
      %755 = vmatprep.subr.mxu0 0.0
      %756 = vmatpush1.msra.mxu0 0.0
      %757 = vmatprep.mubr.f32.mxu0 0.0
      %758 = vmatmul.mubr.f32.gmra.mrb[0].mxu0 %v688
      %v759 = vpop.f32.mrb[0].mxu0
      %v760 = vadd.f32 0.0, %v759
      %v761 = vpop.f32.mrb[0].mxu0
      %v762 = vadd.f32 0.0, %v761
      %763 = vmatprep.mubr.f32.mxu0 0.0
      %764 = vmatmul.mubr.f32.gmra.mrb[0].mxu0 %v691
      %v765 = vpop.f32.mrb[0].mxu0
      %v766 = vadd.f32 0.0, %v765
      %v767 = vpop.f32.mrb[0].mxu0
      %v768 = vadd.f32 0.0, %v767
      %769 = vdwg.mxu0
      %v771 = vsel %vm686, %v584, 0
      %v774 = vsel %vm686, %v585, 0
      %776 = vmatprep.subr.mxu0 %v587
      %777 = vmatpush1.msra.mxu0 %v586
      %778 = vmatprep.subr.mxu0 %v589
      %779 = vmatpush1.msra.mxu0 %v588
      %780 = vmatprep.subr.mxu0 %v591
      %781 = vmatpush1.msra.mxu0 %v590
      %782 = vmatprep.subr.mxu0 %v593
      %783 = vmatpush1.msra.mxu0 %v592
      %784 = vmatprep.subr.mxu0 %v595
      %785 = vmatpush1.msra.mxu0 %v594
      %786 = vmatprep.subr.mxu0 %v597
      %787 = vmatpush1.msra.mxu0 %v596
      %788 = vmatprep.subr.mxu0 0.0
      %789 = vmatpush1.msra.mxu0 0.0
      %790 = vmatprep.subr.mxu0 0.0
      %791 = vmatpush1.msra.mxu0 0.0
      %792 = vmatprep.subr.mxu0 0.0
      %793 = vmatpush1.msra.mxu0 0.0
      %794 = vmatprep.subr.mxu0 0.0
      %795 = vmatpush1.msra.mxu0 0.0
      %796 = vmatprep.subr.mxu0 0.0
      %797 = vmatpush1.msra.mxu0 0.0
      %798 = vmatprep.subr.mxu0 0.0
      %799 = vmatpush1.msra.mxu0 0.0
      %800 = vmatprep.subr.mxu0 0.0
      %801 = vmatpush1.msra.mxu0 0.0
      %802 = vmatprep.subr.mxu0 0.0
      %803 = vmatpush1.msra.mxu0 0.0
      %804 = vmatprep.subr.mxu0 0.0
      %805 = vmatpush1.msra.mxu0 0.0
      %806 = vmatprep.subr.mxu0 0.0
      %807 = vmatpush1.msra.mxu0 0.0
      %808 = vmatprep.subr.mxu0 0.0
      %809 = vmatpush1.msra.mxu0 0.0
      %810 = vmatprep.subr.mxu0 0.0
      %811 = vmatpush1.msra.mxu0 0.0
      %812 = vmatprep.subr.mxu0 0.0
      %813 = vmatpush1.msra.mxu0 0.0
      %814 = vmatprep.subr.mxu0 0.0
      %815 = vmatpush1.msra.mxu0 0.0
      %816 = vmatprep.subr.mxu0 0.0
      %817 = vmatpush1.msra.mxu0 0.0
      %818 = vmatprep.subr.mxu0 0.0
      %819 = vmatpush1.msra.mxu0 0.0
      %820 = vmatprep.subr.mxu0 0.0
      %821 = vmatpush1.msra.mxu0 0.0
      %822 = vmatprep.subr.mxu0 0.0
      %823 = vmatpush1.msra.mxu0 0.0
      %824 = vmatprep.subr.mxu0 0.0
      %825 = vmatpush1.msra.mxu0 0.0
      %826 = vmatprep.subr.mxu0 0.0
      %827 = vmatpush1.msra.mxu0 0.0
      %828 = vmatprep.subr.mxu0 0.0
      %829 = vmatpush1.msra.mxu0 0.0
      %830 = vmatprep.subr.mxu0 0.0
      %831 = vmatpush1.msra.mxu0 0.0
      %832 = vmatprep.subr.mxu0 0.0
      %833 = vmatpush1.msra.mxu0 0.0
      %834 = vmatprep.subr.mxu0 0.0
      %835 = vmatpush1.msra.mxu0 0.0
      %836 = vmatprep.subr.mxu0 0.0
      %837 = vmatpush1.msra.mxu0 0.0
      %838 = vmatprep.subr.mxu0 0.0
      %839 = vmatpush1.msra.mxu0 0.0
      %840 = vmatprep.mubr.f32.mxu0 0.0
      %841 = vmatmul.mubr.f32.gmra.mrb[0].mxu0 %v771
      %v842 = vpop.f32.mrb[0].mxu0
      %v843 = vadd.f32 %v760, %v842
      %v844 = vpop.f32.mrb[0].mxu0
      %v845 = vadd.f32 %v762, %v844
      %846 = vmatprep.mubr.f32.mxu0 0.0
      %847 = vmatmul.mubr.f32.gmra.mrb[0].mxu0 %v774
      %v848 = vpop.f32.mrb[0].mxu0
      %v849 = vadd.f32 %v766, %v848
      %v850 = vpop.f32.mrb[0].mxu0
      %v851 = vadd.f32 %v768, %v850
      %852 = vdwg.mxu0
      %s853 = scalar_lea.vmem %s5, 32
      %v854 = vld [vmem:[%s853] sm:$0xff]
      %v855 = vld [vmem:[%s853 + $0x8] sm:$0xf]
      %856 = vrot.lane.b32.xlu0 %v586, 96
      %v857 = vpop.permute.xlu0 %856
      %858 = vrot.lane.b32.xlu0 %v587, 96
      %v859 = vpop.permute.xlu0 %858
      %860 = vrot.lane.b32.xlu0 %v601, 96
      %v861 = vpop.permute.xlu0 %860
      %862 = vrot.lane.b32.xlu0 %v588, 96
      %v863 = vpop.permute.xlu0 %862
      %864 = vrot.lane.b32.xlu0 %v589, 96
      %v865 = vpop.permute.xlu0 %864
      %866 = vrot.lane.b32.xlu0 %v602, 96
      %v867 = vpop.permute.xlu0 %866
      %868 = vrot.lane.b32.xlu0 %v590, 96
      %v869 = vpop.permute.xlu0 %868
      %870 = vrot.lane.b32.xlu0 %v591, 96
      %v871 = vpop.permute.xlu0 %870
      %872 = vrot.lane.b32.xlu0 %v603, 96
      %v873 = vpop.permute.xlu0 %872
      %874 = vrot.lane.b32.xlu0 %v592, 96
      %v875 = vpop.permute.xlu0 %874
      %876 = vrot.lane.b32.xlu0 %v593, 96
      %v877 = vpop.permute.xlu0 %876
      %878 = vrot.lane.b32.xlu0 %v604, 96
      %v879 = vpop.permute.xlu0 %878
      %880 = vrot.lane.b32.xlu0 %v594, 96
      %v881 = vpop.permute.xlu0 %880
      %882 = vrot.lane.b32.xlu0 %v595, 96
      %v883 = vpop.permute.xlu0 %882
      %884 = vrot.lane.b32.xlu0 %v605, 96
      %v885 = vpop.permute.xlu0 %884
      %886 = vrot.lane.b32.xlu0 %v596, 96
      %v887 = vpop.permute.xlu0 %886
      %888 = vrot.lane.b32.xlu0 %v597, 96
      %v889 = vpop.permute.xlu0 %888
      %890 = vrot.lane.b32.xlu0 %v606, 96
      %v891 = vpop.permute.xlu0 %890
      %vm892 = vcmask 785408
      %v893 = vsel %vm892, %v857, %v859
      %v894 = vsel %vm892, %v859, %v861
      %v895 = vsel %vm892, %v863, %v865
      %v896 = vsel %vm892, %v865, %v867
      %v897 = vsel %vm892, %v869, %v871
      %v898 = vsel %vm892, %v871, %v873
      %v899 = vsel %vm892, %v875, %v877
      %v900 = vsel %vm892, %v877, %v879
      %v901 = vsel %vm892, %v881, %v883
      %v902 = vsel %vm892, %v883, %v885
      %v903 = vsel %vm892, %v887, %v889
      %v904 = vsel %vm892, %v889, %v891
      %v918 = vsel %vm686, %v854, 0
      %v921 = vsel %vm686, %v855, 0
      %923 = vmatprep.subr.mxu0 %v894
      %924 = vmatpush1.msra.mxu0 %v893
      %925 = vmatprep.subr.mxu0 %v896
      %926 = vmatpush1.msra.mxu0 %v895
      %927 = vmatprep.subr.mxu0 %v898
      %928 = vmatpush1.msra.mxu0 %v897
      %929 = vmatprep.subr.mxu0 %v900
      %930 = vmatpush1.msra.mxu0 %v899
      %931 = vmatprep.subr.mxu0 %v902
      %932 = vmatpush1.msra.mxu0 %v901
      %933 = vmatprep.subr.mxu0 %v904
      %934 = vmatpush1.msra.mxu0 %v903
      %935 = vmatprep.subr.mxu0 0.0
      %936 = vmatpush1.msra.mxu0 0.0
      %937 = vmatprep.subr.mxu0 0.0
      %938 = vmatpush1.msra.mxu0 0.0
      %939 = vmatprep.subr.mxu0 0.0
      %940 = vmatpush1.msra.mxu0 0.0
      %941 = vmatprep.subr.mxu0 0.0
      %942 = vmatpush1.msra.mxu0 0.0
      %943 = vmatprep.subr.mxu0 0.0
      %944 = vmatpush1.msra.mxu0 0.0
      %945 = vmatprep.subr.mxu0 0.0
      %946 = vmatpush1.msra.mxu0 0.0
      %947 = vmatprep.subr.mxu0 0.0
      %948 = vmatpush1.msra.mxu0 0.0
      %949 = vmatprep.subr.mxu0 0.0
      %950 = vmatpush1.msra.mxu0 0.0
      %951 = vmatprep.subr.mxu0 0.0
      %952 = vmatpush1.msra.mxu0 0.0
      %953 = vmatprep.subr.mxu0 0.0
      %954 = vmatpush1.msra.mxu0 0.0
      %955 = vmatprep.subr.mxu0 0.0
      %956 = vmatpush1.msra.mxu0 0.0
      %957 = vmatprep.subr.mxu0 0.0
      %958 = vmatpush1.msra.mxu0 0.0
      %959 = vmatprep.subr.mxu0 0.0
      %960 = vmatpush1.msra.mxu0 0.0
      %961 = vmatprep.subr.mxu0 0.0
      %962 = vmatpush1.msra.mxu0 0.0
      %963 = vmatprep.subr.mxu0 0.0
      %964 = vmatpush1.msra.mxu0 0.0
      %965 = vmatprep.subr.mxu0 0.0
      %966 = vmatpush1.msra.mxu0 0.0
      %967 = vmatprep.subr.mxu0 0.0
      %968 = vmatpush1.msra.mxu0 0.0
      %969 = vmatprep.subr.mxu0 0.0
      %970 = vmatpush1.msra.mxu0 0.0
      %971 = vmatprep.subr.mxu0 0.0
      %972 = vmatpush1.msra.mxu0 0.0
      %973 = vmatprep.subr.mxu0 0.0
      %974 = vmatpush1.msra.mxu0 0.0
      %975 = vmatprep.subr.mxu0 0.0
      %976 = vmatpush1.msra.mxu0 0.0
      %977 = vmatprep.subr.mxu0 0.0
      %978 = vmatpush1.msra.mxu0 0.0
      %979 = vmatprep.subr.mxu0 0.0
      %980 = vmatpush1.msra.mxu0 0.0
      %981 = vmatprep.subr.mxu0 0.0
      %982 = vmatpush1.msra.mxu0 0.0
      %983 = vmatprep.subr.mxu0 0.0
      %984 = vmatpush1.msra.mxu0 0.0
      %985 = vmatprep.subr.mxu0 0.0
      %986 = vmatpush1.msra.mxu0 0.0
      %987 = vmatprep.mubr.f32.mxu0 0.0
      %988 = vmatmul.mubr.f32.gmra.mrb[0].mxu0 %v918
      %v989 = vpop.f32.mrb[0].mxu0
      %v990 = vadd.f32 0.0, %v989
      %v991 = vpop.f32.mrb[0].mxu0
      %v992 = vadd.f32 0.0, %v991
      %993 = vmatprep.mubr.f32.mxu0 0.0
      %994 = vmatmul.mubr.f32.gmra.mrb[0].mxu0 %v921
      %v995 = vpop.f32.mrb[0].mxu0
      %v996 = vadd.f32 0.0, %v995
      %v997 = vpop.f32.mrb[0].mxu0
      %v998 = vadd.f32 0.0, %v997
      %999 = vdwg.mxu0
      %v1000 = vadd.f32 %v843, %v990
      %v1001 = vadd.f32 %v845, %v992
      %v1002 = vadd.f32 %v849, %v996
      %v1003 = vadd.f32 %v851, %v998
      %1004 = vst [vmem:[%s305] sm:$0xff] %v1000
      %1005 = vst [vmem:[%s305 + $0x8] sm:$0xff] %v1001
      %1006 = vst [vmem:[%s305 + $0x10] sm:$0xf] %v1002
      %1007 = vst [vmem:[%s305 + $0x18] sm:$0xf] %v1003
      %p1008 = scmp.lt.s32.totalorder %s19, 1
      %s1009 = scalar_select %p1008, %s19, 1
      %s1010 = smul.addr %s1009, 4
      %s1011 = smul.addr %s1010, 8
      %s1012 = scalar_lea.vmem %s8, %s1011
      // Predicated region
      $region53: #{tpu_custom_call.1} parent=51 // pred_check
        %p1013 = pneg %p210
      $region54: #{tpu_custom_call.1} parent=51 // pred_check_branch
        %1015 = sbr.rel (%p1013) target = $region56
      $region55: #{tpu_custom_call.1} parent=51 // pred_region
        _
      $region56: #{tpu_custom_call.1} parent=51 // pred_fallthru
        _
    $region52: #{tpu_custom_call.1} parent=5 // pred_fallthru
      _
    %p1016 = scmp.le.s32.totalorder 2, %s14
    // Predicated region
    $region57: #{tpu_custom_call.1} parent=5 // pred_check
      %p1017 = pneg %p1016
    $region58: #{tpu_custom_call.1} parent=5 // pred_check_branch
      %1019 = sbr.rel (%p1017) target = $region60
    $region59: #{tpu_custom_call.1} parent=5 // pred_region
      %s1020 = ssub.s32 %s14, 2
      // Predicated region
      $region61: #{tpu_custom_call.1} parent=59 // pred_check
        %p1021 = pneg %p216
      $region62: #{tpu_custom_call.1} parent=59 // pred_check_branch
        %1023 = sbr.rel (%p1021) target = $region64
      $region63: #{tpu_custom_call.1} parent=59 // pred_region
        %p1024 = scmp.lt.s32.totalorder %s20, 1
        %s1025 = scalar_select %p1024, %s20, 1
        %s1026 = smul.addr %s1025, 4
        %s1027 = smul.addr %s1026, 8
        %s1028 = scalar_lea.vmem %s8, %s1027
      $region64: #{tpu_custom_call.1} parent=59 // pred_fallthru
        _
    $region60: #{tpu_custom_call.1} parent=5 // pred_fallthru
      _
  $region6: #{tpu_custom_call.1} parent=0 // loop_footer
    %s18 = sadd.s32 1, %s14
  $region7: #{tpu_custom_call.1} parent=0 // loop_footer_branch
    %13 = sbr.rel target = $region3
  $region8: #{tpu_custom_call.1} parent=0 // loop_exit
    _

</llo_original>
